<compile_context>
chip_gen: v6e
topology: v6e:2x2x1
jax: 0.10.0
libtpu: 0.0.40
codegen_flags: <defaults>
</compile_context>

<pallas_src>
import functools

import jax
import jax.numpy as jnp
from jax.experimental import pallas as pl
from jax.experimental.pallas import tpu as pltpu


def _round_up(x, m):
    return (x + m - 1) // m * m


def _device_config():
    """Returns (tm_nominal, vmem_budget_bytes)."""
    vmem_cap = None
    try:
        info = pltpu.get_tpu_info()
        vmem_cap = getattr(info, "vmem_capacity_bytes", None)
    except Exception:
        vmem_cap = None
    try:
        kind = jax.devices()[0].device_kind.lower()
    except Exception:
        kind = ""
    if "v6" in kind:
        tm_nom = 2048          # 128 MiB VMEM: big tiles amortize per-step overhead
    elif "v5e" in kind or "v5 lite" in kind or "v5lite" in kind:
        tm_nom = 1024          # lowest HBM BW; resident weights flip it compute-bound
    elif "7" in kind:
        tm_nom = 1024          # 64 MiB/TC and 2 TCs each need their own buffers
    else:
        tm_nom = 1024
    if vmem_cap is None:
        vmem_cap = (64 << 20) if "7" in kind else (128 << 20)
    return tm_nom, int(vmem_cap * 3 // 4)   # leave compiler/pipeline headroom


def _patch_embed_kernel(x_ref, w_ref, b_ref, o_ref):
    # x_ref: (tm, K) bf16 patch tile; w_ref: (K, tn) bf16; b_ref: (1, tn) f32
    acc = jnp.dot(x_ref[...], w_ref[...], preferred_element_type=jnp.float32)
    o_ref[...] = (acc + b_ref[...]).astype(o_ref.dtype)


def patch_embedding_forward(x, weight, bias, patch_size, *,
                            compute_dtype=jnp.bfloat16, out_dtype=None):
    """x: (B, C, H, W), weight: (E, C, P, P), bias: (E,) -> (B, num_patches, E)."""
    B, C, H, W = x.shape
    E = weight.shape[0]
    P = patch_size
    if H % P != 0 or W % P != 0:
        raise ValueError(f"spatial dims ({H},{W}) must be divisible by patch {P}")
    hp, wp = H // P, W // P
    num_patches = hp * wp
    if out_dtype is None:
        out_dtype = compute_dtype

    # TODO(synk): fully fuse the patch gather into the kernel (x with
    # memory_space=pl.ANY + strided make_async_copy per (c, patch-row) landing in
    # a bf16 staging tile). For now cast to bf16 FIRST so the transpose copy
    # moves half the bytes, and leave the gather itself as XLA glue.
    xb = x.astype(compute_dtype)
    patches = xb.reshape(B, C, hp, P, wp, P)
    patches = patches.transpose(0, 2, 4, 1, 3, 5)              # (B, hp, wp, C, P, P)
    patches = patches.reshape(B * num_patches, C * P * P)      # (M, K) bf16

    M, K = patches.shape
    N = E
    N_pad = _round_up(N, 128)                                  # lane-dense output
    in_bytes = jnp.dtype(compute_dtype).itemsize
    out_bytes = jnp.dtype(out_dtype).itemsize

    w_mat = weight.reshape(E, C * P * P).T.astype(compute_dtype)   # (K, N)
    b_mat = bias.reshape(1, E).astype(jnp.float32)                 # f32 bias add
    if N_pad != N:
        w_mat = jnp.pad(w_mat, ((0, 0), (0, N_pad - N)))
        b_mat = jnp.pad(b_mat, ((0, 0), (0, N_pad - N)))

    tm_nom, vmem_budget = _device_config()

    # Keep the full (K, N_pad) weight + bias resident in VMEM whenever it fits
    # comfortably (always true for ViT sizes); otherwise fall back to N-tiling
    # with M as the SLOW grid axis so only the small weight is re-streamed.
    if 2 * K * N_pad * in_bytes <= vmem_budget // 4:
        tn = N_pad
    else:
        tn = min(512, N_pad)

    tm = min(tm_nom, _round_up(M, 16))       # sublane aligned (bf16 packing)
    # Megacore (v7x) balance: prefer >= 2 M-blocks so both TCs get work.
    if pl.cdiv(M, tm) < 2 and M > 16:
        tm = max(16, _round_up(pl.cdiv(M, 2), 16))

    def _need(tm_, tn_):
        # Conservative: patch tile + output tile double-buffered; weight/bias
        # counted double-buffered too even though their block index is constant
        # (Pallas only DMAs them once, but may still allocate two buffers).
        return (2 * tm_ * K * in_bytes
                + 2 * K * tn_ * in_bytes
                + 2 * tn_ * 4
                + 2 * tm_ * tn_ * out_bytes)

    while _need(tm, tn) > vmem_budget and tm > 16:
        tm = max(16, _round_up(tm // 2, 16))   # stay a multiple of 16

    mt = pl.cdiv(M, tm)
    nt = pl.cdiv(N_pad, tn)
    grid = (mt, nt)                            # M slow, N fast (trivial when nt == 1)

    # Actual streamed bytes: patches once; weight re-streamed mt times only in
    # the (rare) N-tiled fallback; output written once in out_dtype.
    w_streams = 1 if nt == 1 else mt
    cost = pl.CostEstimate(
        flops=2 * M * K * N_pad,
        transcendentals=0,
        bytes_accessed=(M * K * in_bytes
                        + w_streams * K * N_pad * in_bytes
                        + w_streams * N_pad * 4
                        + M * N_pad * out_bytes),
    )

    vmem_limit = int(min(vmem_budget, max(_need(tm, tn) + (4 << 20), 32 << 20)))

    out = pl.pallas_call(
        _patch_embed_kernel,
        out_shape=jax.ShapeDtypeStruct((M, N_pad), out_dtype),
        grid=grid,
        in_specs=[
            # Patch tile depends only on the slow M axis -> fetched exactly once.
            pl.BlockSpec((tm, K), lambda i, j: (i, 0)),
            # Weight/bias: constant block index when nt == 1 -> resident in VMEM.
            pl.BlockSpec((K, tn), lambda i, j: (0, j)),
            pl.BlockSpec((1, tn), lambda i, j: (0, j)),
        ],
        out_specs=pl.BlockSpec((tm, tn), lambda i, j: (i, j)),
        compiler_params=pltpu.CompilerParams(
            dimension_semantics=("parallel", "parallel"),  # M axis shards across TCs (v7x)
            vmem_limit_bytes=vmem_limit,
        ),
        cost_estimate=cost,
    )(patches, w_mat, b_mat)

    out = out[:M, :N]                           # drop N padding (and nothing on M)
    return out.reshape(B, num_patches, E)


def reference_forward(x, weight, bias, patch_size):
    """Pure-JAX reference: conv2d (stride=kernel=P) + flatten(2).transpose(1,2)."""
    y = jax.lax.conv_general_dilated(
        x, weight,
        window_strides=(patch_size, patch_size),
        padding="VALID",
        dimension_numbers=("NCHW", "OIHW", "NCHW"),
    ) + bias.reshape(1, -1, 1, 1)
    B, E, hp, wp = y.shape
    return y.reshape(B, E, hp * wp).transpose(0, 2, 1)


if __name__ == "__main__":
    # Small shapes consistent with the module: B=2, C=4, img=16, patch=4, E=32
    B, C, IMG, P, E = 2, 4, 16, 4, 32

    key = jax.random.PRNGKey(0)
    kx, kw, kb = jax.random.split(key, 3)
    x = jax.random.normal(kx, (B, C, IMG, IMG), dtype=jnp.float32)
    weight = jax.random.normal(kw, (E, C, P, P), dtype=jnp.float32) * 0.02
    bias = jax.random.normal(kb, (E,), dtype=jnp.float32) * 0.02

    fwd = jax.jit(functools.partial(patch_embedding_forward, patch_size=P))
    out = jax.block_until_ready(fwd(x, weight, bias))

    ref = reference_forward(x, weight, bias, P)
    assert out.shape == (B, (IMG // P) ** 2, E), out.shape
    # bf16 operands + bf16 output with f32 accumulation -> loosened tolerance
    assert jnp.allclose(out.astype(jnp.float32), ref, atol=2e-2, rtol=2e-2), \
        "mismatch vs reference"

    print("KERNEL_OK")
</pallas_src>

<mosaic_0001>
module attributes {stable_mosaic.version = 11 : i64} {
  func.func @_patch_embed_kernel(%arg0: i32, %arg1: i32, %arg2: memref<16x64xbf16, #tpu.memory_space<vmem>>, %arg3: memref<64x128xbf16, #tpu.memory_space<vmem>>, %arg4: memref<1x128xf32, #tpu.memory_space<vmem>>, %arg5: memref<16x128xbf16, #tpu.memory_space<vmem>>) attributes {dimension_semantics = [#tpu.dimension_semantics<parallel>, #tpu.dimension_semantics<parallel>], iteration_bounds = array<i64: 2, 1>, scalar_prefetch = 0 : i64, scratch_operands = 0 : i64, tpu.core_type = #tpu.core_type<tc>, window_params = [{transform_indices = @transform_0, window_bounds = array<i64: 16, 64>}, {transform_indices = @transform_1, window_bounds = array<i64: 64, 128>}, {transform_indices = @transform_2, window_bounds = array<i64: 1, 128>}, {transform_indices = @transform_3, window_bounds = array<i64: 16, 128>}]} {
    %c0 = arith.constant 0 : index
    %c0_0 = arith.constant 0 : index
    %0 = vector.load %arg2[%c0, %c0_0] : memref<16x64xbf16, #tpu.memory_space<vmem>>, vector<16x64xbf16>
    %c0_1 = arith.constant 0 : index
    %c0_2 = arith.constant 0 : index
    %1 = vector.load %arg3[%c0_1, %c0_2] : memref<64x128xbf16, #tpu.memory_space<vmem>>, vector<64x128xbf16>
    %cst = arith.constant dense<0.000000e+00> : vector<16x128xf32>
    %2 = tpu.matmul %0, %1, %cst {dimension_numbers = #tpu.dot_dimension_numbers<[1], [0], [0], [1], [0, 0, 1, 1], [], []>} : vector<16x64xbf16>, vector<64x128xbf16>, vector<16x128xf32> -> vector<16x128xf32>
    %c0_3 = arith.constant 0 : index
    %c0_4 = arith.constant 0 : index
    %3 = vector.load %arg4[%c0_3, %c0_4] : memref<1x128xf32, #tpu.memory_space<vmem>>, vector<1x128xf32>
    %4 = vector.broadcast %3 : vector<1x128xf32> to vector<16x128xf32>
    %5 = arith.addf %2, %4 : vector<16x128xf32>
    %6 = arith.truncf %5 : vector<16x128xf32> to vector<16x128xbf16>
    %c0_5 = arith.constant 0 : index
    %c0_6 = arith.constant 0 : index
    %7 = vector.load %arg5[%c0_5, %c0_6] : memref<16x128xbf16, #tpu.memory_space<vmem>>, vector<16x128xbf16>
    tpu.vector_store %arg5[%c0_5, %c0_6], %6 {strides = array<i32>} : memref<16x128xbf16, #tpu.memory_space<vmem>>, vector<16x128xbf16>,
    return
  }
  func.func @transform_0(%arg0: i32, %arg1: i32) -> (i32, i32) {
    %c0_i32 = arith.constant 0 : i32
    %c0_i32_0 = arith.constant 0 : i32
    return %arg0, %c0_i32 : i32, i32
  }
  func.func @transform_1(%arg0: i32, %arg1: i32) -> (i32, i32) {
    %c0_i32 = arith.constant 0 : i32
    %c0_i32_0 = arith.constant 0 : i32
    return %c0_i32, %arg1 : i32, i32
  }
  func.func @transform_2(%arg0: i32, %arg1: i32) -> (i32, i32) {
    %c0_i32 = arith.constant 0 : i32
    %c0_i32_0 = arith.constant 0 : i32
    return %c0_i32, %arg1 : i32, i32
  }
  func.func @transform_3(%arg0: i32, %arg1: i32) -> (i32, i32) {
    %c0_i32 = arith.constant 0 : i32
    return %arg0, %arg1 : i32, i32
  }
}

</mosaic_0001>

<llo_original>
// kernel: patch_embedding_forward.1
$region0: #{patch_embedding_forward.1}
  #allocation0 [shape = 'u32[]', space=smem, size = 0x4, offset = 0x4, fixed_abs, tag = 'smem constant byte address 0x4 - core index']
  #allocation1 [shape = 'u32[144,128]{1,0:T(1,128)}', space=vmem, size = 0x12000, scoped, tag = 'internal scratch']
  %s0 = inlined_call_operand.vmem [shape: bf16[32,64], index: 0, kind: input, shape index: {}]
  %s1 = inlined_call_operand.vmem [shape: bf16[64,128], index: 1, kind: input, shape index: {}]
  %s2 = inlined_call_operand.vmem [shape: f32[1,128], index: 2, kind: input, shape index: {}]
  %s3 = inlined_call_operand.hbm [shape: bf16[32,128], index: 3, kind: output, shape index: {}]
  %s4 = sld [smem:[#allocation0]]
  $region45: #{patch_embedding_forward.1} parent=0
    _
  %s6 = ssub.s32 1, %s4
  %s7 = scalar_select 0, %s6, %s4
  $region1: #{patch_embedding_forward.1} parent=0
    #allocation2 [shape = 'u8[8192]{0}', space=vmem, size = 0x2000, scoped, tag = 'output window, operand 0']
    #allocation3 [shape = 's32[2]{0}', space=sflag, size = 0x8, scoped, tag = 'scoped memory for patch_embedding_forward.1']
    %8 = vsyncpa [#allocation3], 0
    %s9 = scalar_lea.sflag [#allocation3], 1
    %10 = vsyncpa %s9, 0
    loop: start=0, step=1, limit=4
    $region2: #{patch_embedding_forward.1} parent=1 // loop_pre_header
      _
    $region3: #{patch_embedding_forward.1} parent=1 // loop_header
      %s12 = sphi 0, %s16
      %p13 = scmp.ge.s32.totalorder %s12, 4
      %s19 = sphi 0, %s31
      %s20 = sphi 0, %s27
      %s21 = sphi 0, %s19
      %s22 = sphi 0, %s20
      %s23 = sphi 0, %s21
      %s24 = sphi 0, %s22
      %s34 = sphi 0, %s36
      %s37 = sphi 0, %s34
      %s38 = sphi 0, %s37
      %s54 = sphi 0, %s38
      %s60 = sphi 0, %s62
      %s63 = sphi 0, %s60
      %s64 = sphi 0, %s63
      %s80 = sphi 0, %s64
      %s86 = sphi 0, %s88
      %s89 = sphi 0, %s86
      %s90 = sphi 0, %s89
      %s106 = sphi 0, %s90
      %s114 = sphi 0, %s116
      %s117 = sphi 0, %s114
      %s118 = sphi 0, %s117
      %s134 = sphi 0, %s118
    $region4: #{patch_embedding_forward.1} parent=1 // loop_header_branch
      %15 = sbr.rel (%p13) target = $region8
    $region5: #{patch_embedding_forward.1} parent=1 // loop_body
      %s17 = ssub.s32 %s12, 1
      %s18 = ssub.s32 %s12, 2
      %s25 = sadd.s32 1, %s20
      %p26 = scmp.ge.s32.totalorder %s25, 1
      %s27 = scalar_select %p26, 0, %s25
      %s28 = sadd.s32 1, %s19
      %s29 = scalar_select %p26, %s28, %s19
      %p30 = scmp.ge.s32.totalorder %s29, 2
      %s31 = scalar_select %p30, 0, %s29
      %s32 = ssub.s32 %s19, %s31
      %p33 = scmp.eq.s32.totalorder %s32, 0
      %s35 = sadd.s32 %s34, 1
      %s36 = scalar_select %p33, %s34, %s35
      %p39 = pneg %p33
      %p40 = scmp.eq.s32.totalorder %s12, 1
      %p41 = por %p39, %p40
      %p42 = scmp.ne.s32.totalorder %s34, %s37
      %p43 = scmp.eq.s32.totalorder %s12, 0
      %p44 = por %p42, %p43
      %p45 = scmp.ne.s32.totalorder %s34, %s37
      %p46 = scmp.eq.s32.totalorder %s17, 1
      %p47 = por %p45, %p46
      %p48 = scmp.ne.s32.totalorder %s37, %s38
      %p49 = scmp.eq.s32.totalorder %s17, 0
      %p50 = por %p48, %p49
      %p51 = scmp.ne.s32.totalorder %s37, %s38
      %p52 = scmp.eq.s32.totalorder %s18, 1
      %p53 = por %p51, %p52
      %p55 = scmp.ne.s32.totalorder %s38, %s54
      %p56 = scmp.eq.s32.totalorder %s18, 0
      %p57 = por %p55, %p56
      %s58 = ssub.s32 %s20, %s27
      %p59 = scmp.eq.s32.totalorder %s58, 0
      %s61 = sadd.s32 %s60, 1
      %s62 = scalar_select %p59, %s60, %s61
      %p65 = pneg %p59
      %p66 = scmp.eq.s32.totalorder %s12, 1
      %p67 = por %p65, %p66
      %p68 = scmp.ne.s32.totalorder %s60, %s63
      %p69 = scmp.eq.s32.totalorder %s12, 0
      %p70 = por %p68, %p69
      %p71 = scmp.ne.s32.totalorder %s60, %s63
      %p72 = scmp.eq.s32.totalorder %s17, 1
      %p73 = por %p71, %p72
      %p74 = scmp.ne.s32.totalorder %s63, %s64
      %p75 = scmp.eq.s32.totalorder %s17, 0
      %p76 = por %p74, %p75
      %p77 = scmp.ne.s32.totalorder %s63, %s64
      %p78 = scmp.eq.s32.totalorder %s18, 1
      %p79 = por %p77, %p78
      %p81 = scmp.ne.s32.totalorder %s64, %s80
      %p82 = scmp.eq.s32.totalorder %s18, 0
      %p83 = por %p81, %p82
      %s84 = ssub.s32 %s20, %s27
      %p85 = scmp.eq.s32.totalorder %s84, 0
      %s87 = sadd.s32 %s86, 1
      %s88 = scalar_select %p85, %s86, %s87
      %p91 = pneg %p85
      %p92 = scmp.eq.s32.totalorder %s12, 1
      %p93 = por %p91, %p92
      %p94 = scmp.ne.s32.totalorder %s86, %s89
      %p95 = scmp.eq.s32.totalorder %s12, 0
      %p96 = por %p94, %p95
      %p97 = scmp.ne.s32.totalorder %s86, %s89
      %p98 = scmp.eq.s32.totalorder %s17, 1
      %p99 = por %p97, %p98
      %p100 = scmp.ne.s32.totalorder %s89, %s90
      %p101 = scmp.eq.s32.totalorder %s17, 0
      %p102 = por %p100, %p101
      %p103 = scmp.ne.s32.totalorder %s89, %s90
      %p104 = scmp.eq.s32.totalorder %s18, 1
      %p105 = por %p103, %p104
      %p107 = scmp.ne.s32.totalorder %s90, %s106
      %p108 = scmp.eq.s32.totalorder %s18, 0
      %p109 = por %p107, %p108
      %s110 = ssub.s32 %s19, %s31
      %s111 = ssub.s32 %s20, %s27
      %s112 = sor.u32 %s110, %s111
      %p113 = scmp.eq.s32.totalorder %s112, 0
      %s115 = sadd.s32 %s114, 1
      %s116 = scalar_select %p113, %s114, %s115
      %p119 = pneg %p113
      %p120 = scmp.eq.s32.totalorder %s12, 1
      %p121 = por %p119, %p120
      %p122 = scmp.ne.s32.totalorder %s114, %s117
      %p123 = scmp.eq.s32.totalorder %s12, 0
      %p124 = por %p122, %p123
      %p125 = scmp.ne.s32.totalorder %s114, %s117
      %p126 = scmp.eq.s32.totalorder %s17, 1
      %p127 = por %p125, %p126
      %p128 = scmp.ne.s32.totalorder %s117, %s118
      %p129 = scmp.eq.s32.totalorder %s17, 0
      %p130 = por %p128, %p129
      %p131 = scmp.ne.s32.totalorder %s117, %s118
      %p132 = scmp.eq.s32.totalorder %s18, 1
      %p133 = por %p131, %p132
      %p135 = scmp.ne.s32.totalorder %s118, %s134
      %p136 = scmp.eq.s32.totalorder %s18, 0
      %p137 = por %p135, %p136
      %p138 = scmp.le.s32.totalorder 1, %s12
      %p139 = scmp.lt.s32.totalorder %s12, 3
      %p140 = pnand %p138, %p139
      %p141 = pneg %p140
      // Predicated region
      $region9: #{patch_embedding_forward.1} parent=5 // pred_check
        _
      $region10: #{patch_embedding_forward.1} parent=5 // pred_check_branch
        %143 = sbr.rel (%p140) target = $region12
      $region11: #{patch_embedding_forward.1} parent=5 // pred_region
        %s144 = ssub.s32 %s12, 1
        // Predicated region
        $region13: #{patch_embedding_forward.1} parent=11 // pred_check
          %p145 = pneg %p76
        $region14: #{patch_embedding_forward.1} parent=11 // pred_check_branch
          %147 = sbr.rel (%p145) target = $region16
        $region15: #{patch_embedding_forward.1} parent=11 // pred_region
          %p148 = scmp.lt.s32.totalorder %s22, 0
          %s149 = scalar_select %p148, %s22, 0
          %s150 = smul.addr %s149, 4
          %s151 = scalar_lea.vmem %s1, %s150
        $region16: #{patch_embedding_forward.1} parent=11 // pred_fallthru
          _
        // Predicated region
        $region17: #{patch_embedding_forward.1} parent=11 // pred_check
          %p152 = pneg %p102
        $region18: #{patch_embedding_forward.1} parent=11 // pred_check_branch
          %154 = sbr.rel (%p152) target = $region20
        $region19: #{patch_embedding_forward.1} parent=11 // pred_region
          %p155 = scmp.lt.s32.totalorder %s22, 0
          %s156 = scalar_select %p155, %s22, 0
          %s157 = scalar_lea.vmem %s2, %s156
        $region20: #{patch_embedding_forward.1} parent=11 // pred_fallthru
          _
      $region12: #{patch_embedding_forward.1} parent=5 // pred_fallthru
        _
      %p158 = scmp.lt.s32.totalorder %s12, 2
      // Predicated region
      $region21: #{patch_embedding_forward.1} parent=5 // pred_check
        %p159 = pneg %p158
      $region22: #{patch_embedding_forward.1} parent=5 // pred_check_branch
        %161 = sbr.rel (%p159) target = $region24
      $region23: #{patch_embedding_forward.1} parent=5 // pred_region
        // Predicated region
        $region25: #{patch_embedding_forward.1} parent=23 // pred_check
          %p162 = pneg %p44
        $region26: #{patch_embedding_forward.1} parent=23 // pred_check_branch
          %164 = sbr.rel (%p162) target = $region28
        $region27: #{patch_embedding_forward.1} parent=23 // pred_region
          %s165 = smul.u32 2, %s19
          %p166 = scmp.lt.s32.totalorder %s165, 3
          %s167 = scalar_select %p166, %s165, 3
          %s168 = smul.addr %s167, 4
          %s169 = scalar_lea.vmem %s0, %s168
          %s170 = smul.u32 2, %s19
        $region28: #{patch_embedding_forward.1} parent=23 // pred_fallthru
          _
      $region24: #{patch_embedding_forward.1} parent=5 // pred_fallthru
        _
      %p171 = scmp.le.s32.totalorder 1, %s12
      %p172 = scmp.lt.s32.totalorder %s12, 3
      %p173 = pnand %p171, %p172
      %p174 = pneg %p173
      // Predicated region
      $region29: #{patch_embedding_forward.1} parent=5 // pred_check
        _
      $region30: #{patch_embedding_forward.1} parent=5 // pred_check_branch
        %176 = sbr.rel (%p173) target = $region32
      $region31: #{patch_embedding_forward.1} parent=5 // pred_region
        %s177 = ssub.s32 %s12, 1
        %s178 = smul.u32 2, %s21
        %p179 = scmp.lt.s32.totalorder %s178, 3
        %s180 = scalar_select %p179, %s178, 3
        %s181 = smul.addr %s180, 4
        %s182 = scalar_lea.vmem %s0, %s181
        %p183 = pneg %p50
        %p184 = pneg %p47
        %p185 = scmp.lt.s32.totalorder %s22, 0
        %s186 = scalar_select %p185, %s22, 0
        %s187 = smul.addr %s186, 4
        %s188 = scalar_lea.vmem %s1, %s187
        %p189 = pneg %p76
        %p190 = pneg %p73
        %p191 = scmp.lt.s32.totalorder %s22, 0
        %s192 = scalar_select %p191, %s22, 0
        %s193 = scalar_lea.vmem %s2, %s192
        %p194 = pneg %p102
        %p195 = pneg %p99
        %p196 = pneg %p130
        %p197 = pneg %p127
        %s198 = sand.u32 %s117, 1
        %s199 = scalar_lea.sflag [#allocation3], %s198
        %s200 = sand.u32 %s117, 1
        %s201 = smul.addr %s200, 8
        %s202 = scalar_lea.vmem [#allocation2], %s201
        %s203 = smul.u32 2, %s21
        %p204 = scmp.lt.s32.totalorder %s203, 3
        %s205 = scalar_select %p204, %s203, 3
        %s206 = smul.addr %s205, 4
        %s207 = scalar_lea.vmem %s0, %s206
        %s208 = smul.u32 2, %s21
        %p209 = scmp.lt.s32.totalorder %s22, 0
        %s210 = scalar_select %p209, %s22, 0
        %s211 = smul.addr %s210, 4
        %s212 = scalar_lea.vmem %s1, %s211
        %p213 = scmp.lt.s32.totalorder %s22, 0
        %s214 = scalar_select %p213, %s22, 0
        %s215 = scalar_lea.vmem %s2, %s214
        %s216 = smul.u32 2, %s21
        %v218 = vld [vmem:[%s207] sm:$0xf]
        %v219 = vld [vmem:[%s207 + $0x4] sm:$0xf]
        %v220 = vld [vmem:[%s212] sm:$0xf]
        %v221 = vld [vmem:[%s212 + $0x4] sm:$0xf]
        %v222 = vld [vmem:[%s212 + $0x8] sm:$0xf]
        %v223 = vld [vmem:[%s212 + $0xc] sm:$0xf]
        %v224 = vld [vmem:[%s212 + $0x10] sm:$0xf]
        %v225 = vld [vmem:[%s212 + $0x14] sm:$0xf]
        %v226 = vld [vmem:[%s212 + $0x18] sm:$0xf]
        %v227 = vld [vmem:[%s212 + $0x1c] sm:$0xf]
        %v228 = vld [vmem:[%s215] sm:$0x1]
        %v230 = vlaneseq
        %v231 = vshrl.u32 %v230, 7
        %v232 = vsub.s32 0, %v231
        %v233 = vrot.slane %v228, %v232
        %v237 = vunpack.c.l.b16 %v218
        %v238 = vunpack.c.l.b16 %v219
        %v239 = vpack.c.b16 %v238, %v237
        %v248 = vunpack.c.l.b16 %v220
        %v249 = vunpack.c.l.b16 %v221
        %v250 = vunpack.c.l.b16 %v222
        %v251 = vunpack.c.l.b16 %v223
        %v252 = vunpack.c.l.b16 %v224
        %v253 = vunpack.c.l.b16 %v225
        %v254 = vunpack.c.l.b16 %v226
        %v255 = vunpack.c.l.b16 %v227
        %v256 = vpack.c.b16 %v249, %v248
        %v257 = vpack.c.b16 %v251, %v250
        %v258 = vpack.c.b16 %v253, %v252
        %v259 = vpack.c.b16 %v255, %v254
        %vm264 = vcmask 523264
        %v266 = vsel %vm264, %v239, 0
        %268 = vmatprep.subr.bf16.mxu0 0
        %269 = vmatpush1.bf16.msra.mxu0 0
        %270 = vmatprep.subr.bf16.mxu0 0
        %271 = vmatpush1.bf16.msra.mxu0 0
        %272 = vmatprep.subr.bf16.mxu0 0
        %273 = vmatpush1.bf16.msra.mxu0 0
        %274 = vmatprep.subr.bf16.mxu0 0
        %275 = vmatpush1.bf16.msra.mxu0 0
        %276 = vmatprep.subr.bf16.mxu0 0
        %277 = vmatpush1.bf16.msra.mxu0 %v259
        %278 = vmatprep.subr.bf16.mxu0 0
        %279 = vmatpush1.bf16.msra.mxu0 %v258
        %280 = vmatprep.subr.bf16.mxu0 0
        %281 = vmatpush1.bf16.msra.mxu0 %v257
        %282 = vmatprep.subr.bf16.mxu0 0
        %283 = vmatpush1.bf16.msra.mxu0 %v256
        %284 = vmatprep.subr.bf16.mxu0 0
        %285 = vmatpush2.bf16.msra.mxu0 0
        %286 = vmatprep.subr.bf16.mxu0 0
        %287 = vmatpush2.bf16.msra.mxu0 0
        %288 = vmatprep.subr.bf16.mxu0 0
        %289 = vmatpush2.bf16.msra.mxu0 0
        %290 = vmatprep.subr.bf16.mxu0 0
        %291 = vmatpush2.bf16.msra.mxu0 0
        %292 = vmatprep.subr.bf16.mxu0 0
        %293 = vmatpush2.bf16.msra.mxu0 0
        %294 = vmatprep.subr.bf16.mxu0 0
        %295 = vmatpush2.bf16.msra.mxu0 0
        %296 = vmatprep.subr.bf16.mxu0 0
        %297 = vmatpush2.bf16.msra.mxu0 0
        %298 = vmatprep.subr.bf16.mxu0 0
        %299 = vmatpush2.bf16.msra.mxu0 0
        %300 = vmatprep.mubr.bf16.mxu0 0
        %301 = vmatmul.mubr.bf16.gmra.mxu0 %v266
        %v302 = vpop.f32.mrf.mxu0
        %v303 = vadd.f32 %v233, %v302
        %v304 = vpop.f32.mrf.mxu0
        %v305 = vpop.f32.mrf.mxu0
        %v306 = vadd.f32 %v233, %v305
        %v307 = vpop.f32.mrf.mxu0
        %308 = vdwg.mxu0
        %v309 = vpack.c.bf16 %v306, %v303
        %v311 = vunpack.c.l.b16 %v309
        %v312 = vunpack.c.h.b16 %v309
        %v313 = vpack.c.b16 %v311, %v311
        %v314 = vpack.c.b16 %v312, %v312
        %317 = vst [vmem:[%s202] sm:$0xf] %v313
        %318 = vst [vmem:[%s202 + $0x4] sm:$0xf] %v314
        %s319 = sand.u32 %s117, 1
        %s320 = scalar_lea.sflag [#allocation3], %s319
        %s321 = sand.u32 %s117, 1
        %s322 = smul.addr %s321, 8
        %s323 = scalar_lea.vmem [#allocation2], %s322
        // Predicated region
        $region33: #{patch_embedding_forward.1} parent=31 // pred_check
          %p324 = pneg %p127
        $region34: #{patch_embedding_forward.1} parent=31 // pred_check_branch
          %326 = sbr.rel (%p324) target = $region36
        $region35: #{patch_embedding_forward.1} parent=31 // pred_region
          %s327 = smul.u32 2, %s21
          %s329 = ssub.s32 128, 128
          %330 = vsyncadd %s320, %s329
          %s331 = sadd.s32 %s22, %s327
          %s332 = smul.addr %s331, 64
          %s333 = scalar_lea.hbm %s3, %s332
          %s334 = sshll.u32 %s323, 4
          %s335 = int_to_ptr.vmem [resolvable:$true] %s334
          %340 = dma.vmem_to_hbm [thread:$0]  %s335, 128, %s333, %s320, 64, 64, 4
        $region36: #{patch_embedding_forward.1} parent=31 // pred_fallthru
          _
      $region32: #{patch_embedding_forward.1} parent=5 // pred_fallthru
        _
      %p341 = scmp.le.s32.totalorder 2, %s12
      // Predicated region
      $region37: #{patch_embedding_forward.1} parent=5 // pred_check
        %p342 = pneg %p341
      $region38: #{patch_embedding_forward.1} parent=5 // pred_check_branch
        %344 = sbr.rel (%p342) target = $region40
      $region39: #{patch_embedding_forward.1} parent=5 // pred_region
        %s345 = ssub.s32 %s12, 2
        // Predicated region
        $region41: #{patch_embedding_forward.1} parent=39 // pred_check
          %p346 = pneg %p133
        $region42: #{patch_embedding_forward.1} parent=39 // pred_check_branch
          %348 = sbr.rel (%p346) target = $region44
        $region43: #{patch_embedding_forward.1} parent=39 // pred_region
          %s349 = sand.u32 %s118, 1
          %s350 = scalar_lea.sflag [#allocation3], %s349
          %s351 = sand.u32 %s118, 1
          %s352 = smul.addr %s351, 8
          %s353 = scalar_lea.vmem [#allocation2], %s352
          %354 = dma.done %s350, 128
        $region44: #{patch_embedding_forward.1} parent=39 // pred_fallthru
          _
      $region40: #{patch_embedding_forward.1} parent=5 // pred_fallthru
        _
    $region6: #{patch_embedding_forward.1} parent=1 // loop_footer
      %s16 = sadd.s32 1, %s12
    $region7: #{patch_embedding_forward.1} parent=1 // loop_footer_branch
      %11 = sbr.rel target = $region3
    $region8: #{patch_embedding_forward.1} parent=1 // loop_exit
      _
    %355 = vsyncpa [#allocation3], 1
    %s356 = scalar_lea.sflag [#allocation3], 1
    %357 = vsyncpa %s356, 1

</llo_original>
